<compile_context>
chip_gen: v7x
topology: tpu7x:2x2x1
jax: 0.10.0
libtpu: 0.0.40
codegen_flags: <defaults>
</compile_context>

<pallas_src>
import numpy as np
import jax
import jax.numpy as jnp
from jax import lax
from jax.experimental import pallas as pl
from jax.experimental.pallas import tpu as pltpu

LANE = 128


def _round_up(x, m):
    return ((x + m - 1) // m) * m


def _cdiv(a, b):
    return -(-a // b)


def _tpu_topology():
    """(num tensorcores per device, VMEM capacity bytes) — generation aware."""
    kind = ""
    try:
        kind = (jax.devices()[0].device_kind or "").lower()
    except Exception:
        pass
    is_v7 = "v7" in kind
    num_tc = 2 if is_v7 else 1                     # v5e / v6e are single-TC
    vmem_cap = (64 << 20) if is_v7 else (128 << 20)
    try:
        vmem_cap = int(pltpu.get_tpu_info().vmem_capacity_bytes)
    except Exception:
        pass
    return num_tc, vmem_cap


# ----------------------------------------------------------------------------
# Pallas kernel: masked dice partial sums for the 3 prediction channels.
# ----------------------------------------------------------------------------
def _make_dice_kernel(R, tr, kt, sub, groups, needs_mask):
    def kernel(pred_ref, t0_ref, t1_ref, t2_ref, mask_ref, out_ref,
               a_sc, b_sc, c_sc):
        k = pl.program_id(1)

        @pl.when(k == 0)
        def _():
            a_sc[...] = jnp.zeros_like(a_sc)
            b_sc[...] = jnp.zeros_like(b_sc)
            c_sc[...] = jnp.zeros_like(c_sc)

        m = mask_ref[...].astype(jnp.float32)                    # (B, tr, 128)
        B = m.shape[0]

        if needs_mask:
            # Ragged / overhanging tail tile: rows >= row_limit hold
            # unspecified pad data -> zero them explicitly (mask array alone
            # is not safe there).
            blk = pl.program_id(0) * kt + k                      # unclamped
            row_limit = R - blk * tr
            rows = lax.broadcasted_iota(jnp.int32, (1, tr, 1), 1)
            valid = rows < row_limit
            m = jnp.where(valid, m, 0.0)

        def psum(x):
            # Partial reduction to (B, sub, 128): pure full-vreg VALU adds.
            if groups == 1:
                return x
            return jnp.sum(x.reshape(B, groups, sub, LANE), axis=1)

        tgt_refs = (t0_ref, t1_ref, t2_ref)
        for ci in range(3):
            x = pred_ref[:, ci, :, :].astype(jnp.float32)        # (B, tr, 128)
            if needs_mask:
                x = jnp.where(valid, x, 0.0)                     # sigmoid(0)*0 = 0
            # EUP-friendly sigmoid (tanh formulation) -> no VALU divide chain.
            p = 0.5 * jnp.tanh(0.5 * x) + 0.5
            t = (tgt_refs[ci][...].astype(jnp.float32) > 0.5).astype(jnp.float32)
            pm = p * m
            tm = t * m
            a_sc[ci] = a_sc[ci] + psum(pm * tm)
            b_sc[ci] = b_sc[ci] + psum(pm * pm)
            c_sc[ci] = c_sc[ci] + psum(tm * tm)

        @pl.when(k == pl.num_programs(1) - 1)
        def _():
            # Sublane collapse only in the epilogue; output stays lane-dense
            # (last dim 128); the final lane reduce happens in the wrapper.
            out_ref[0, 0] = jnp.sum(a_sc[...], axis=2)           # (3, B, 128)
            out_ref[0, 1] = jnp.sum(b_sc[...], axis=2)
            out_ref[0, 2] = jnp.sum(c_sc[...], axis=2)

    return kernel


def dice_losses_pallas(preds, tgt0, tgt1, tgt2, mask):
    """preds: (B, 3, N) logits (native dtype); tgt*/mask: (B, N).
    Returns (3, B) per-sample dice losses (1 - d), matching TextLoss.dice_loss."""
    B, c3, N = preds.shape
    assert c3 == 3

    num_tc, vmem_cap = _tpu_topology()

    # Pad only to the next multiple of 128 so the zero-copy reshape to
    # (.., rows, 128) is possible; this is a NO-OP whenever H*W is 128-aligned
    # (the common case).  No padding of rows to the tile size — ragged tiles
    # are masked in-kernel instead.
    n_pad = _round_up(N, LANE)

    def prep(x):
        if n_pad != N:
            pad = [(0, 0)] * (x.ndim - 1) + [(0, n_pad - N)]
            x = jnp.pad(x, pad)
        return x

    R = n_pad // LANE                         # number of 128-lane rows

    isz = lambda x: jnp.dtype(x.dtype).itemsize
    bytes_per_row = LANE * B * (3 * isz(preds) + isz(tgt0) + isz(tgt1)
                                + isz(tgt2) + isz(mask))

    # Per-grid-step streamed-input budget, sized per generation so the ~0.35us
    # fixed per-step overhead is <10% of the step's HBM time.
    step_budget = (10 << 20) if vmem_cap <= (64 << 20) else (16 << 20)
    if R < 8:
        tr = R                                # tiny spatial dim: full-dim block
    else:
        tr = max(8, min(step_budget // max(bytes_per_row, 1), 2048) // 8 * 8)
        # Keep double-buffered inputs + elementwise temporaries well under VMEM.
        vmem_row_cost = 2 * bytes_per_row + 10 * B * LANE * 4
        tr = min(tr, max(8, (int(0.7 * vmem_cap) // vmem_row_cost) // 8 * 8))
        tr = min(tr, (R // 8) * 8)            # never exceed the array rows
    sub = min(8, tr)
    groups = tr // sub

    total_blocks = _cdiv(R, tr)
    # Parallel chunks only where they map onto real hardware (2 TCs on v7x);
    # on single-TC chips (v5e / v6e) a split is pure serial overhead.
    P = 2 if (num_tc >= 2 and total_blocks >= 2) else 1
    kt = _cdiv(total_blocks, P)
    needs_mask = (P * kt * tr != R)

    preds4 = prep(preds).reshape(B, 3, R, LANE)
    t0 = prep(tgt0).reshape(B, R, LANE)
    t1 = prep(tgt1).reshape(B, R, LANE)
    t2 = prep(tgt2).reshape(B, R, LANE)
    m4 = prep(mask).reshape(B, R, LANE)

    blk_bytes = tr * bytes_per_row
    vmem_limit = int(min(max(2 * blk_bytes + 10 * B * tr * LANE * 4 + (4 << 20),
                             16 << 20),
                         int(0.85 * vmem_cap)))

    last_blk = total_blocks - 1

    def row_idx(p, k):
        # Clamp so an overhanging tail tile never DMAs fully out of bounds;
        # the kernel zeroes its rows via the iota mask instead.
        return jnp.minimum(p * kt + k, last_blk)

    pred_spec = pl.BlockSpec((B, 3, tr, LANE),
                             lambda p, k: (0, 0, row_idx(p, k), 0))
    row_spec = pl.BlockSpec((B, tr, LANE), lambda p, k: (0, row_idx(p, k), 0))

    kernel = _make_dice_kernel(R, tr, kt, sub, groups, needs_mask)

    partials = pl.pallas_call(
        kernel,
        out_shape=jax.ShapeDtypeStruct((P, 3, 3, B, LANE), jnp.float32),
        grid_spec=pltpu.PrefetchScalarGridSpec(
            num_scalar_prefetch=0,
            grid=(P, kt),
            in_specs=[pred_spec, row_spec, row_spec, row_spec, row_spec],
            out_specs=pl.BlockSpec((1, 3, 3, B, LANE),
                                   lambda p, k: (p, 0, 0, 0, 0)),
            scratch_shapes=[pltpu.VMEM((3, B, sub, LANE), jnp.float32)] * 3,
        ),
        compiler_params=pltpu.CompilerParams(
            dimension_semantics=("parallel", "arbitrary"),
            vmem_limit_bytes=vmem_limit,
        ),
    )(preds4, t0, t1, t2, m4)

    # Final cross-chunk + cross-lane reduction (tiny) in plain JAX.
    sums = partials.sum(axis=(0, 4))              # (3, 3, B): [a, b, c]
    a = sums[0]
    b = sums[1] + 0.001
    c = sums[2] + 0.001
    return 1.0 - 2.0 * a / (b + c)                # (3, B)


# ----------------------------------------------------------------------------
# CTC loss (blank=0, reduction='mean', zero_infinity=True) — torch.nn.CTCLoss
# semantics with padded 2-D targets.
# TODO(synk): CTC forward is a sequential alpha-recursion DP with per-sample
# lengths; no clean Pallas fit, so it stays in plain JAX (lax.scan).
# ----------------------------------------------------------------------------
def ctc_loss_mean(log_probs, targets, input_lengths, target_lengths, blank=0):
    T, B, C = log_probs.shape
    Lmax = targets.shape[1]
    S = 2 * Lmax + 1
    NEG = -jnp.inf

    targets = targets.astype(jnp.int32)
    target_lengths = target_lengths.astype(jnp.int32)
    input_lengths = input_lengths.astype(jnp.int32)

    # Extended label sequence: blank, l1, blank, l2, ..., lL, blank
    ext = jnp.full((B, S), blank, dtype=jnp.int32).at[:, 1::2].set(targets)
    prev2 = jnp.concatenate(
        [jnp.full((B, 2), blank, jnp.int32), ext[:, :-2]], axis=1)
    can_skip = (ext != blank) & (ext != prev2)                    # (B, S)
    s_idx = jnp.arange(S)[None, :]
    valid_state = s_idx < (2 * target_lengths[:, None] + 1)       # (B, S)

    # Per-state emission log-probs: (T, B, S)
    lp_btc = jnp.transpose(log_probs, (1, 0, 2))                  # (B, T, C)
    emit = jnp.take_along_axis(
        lp_btc, jnp.broadcast_to(ext[:, None, :], (B, T, S)), axis=2)
    emit = jnp.transpose(emit, (1, 0, 2)).astype(jnp.float32)     # (T, B, S)

    # alpha at t = 0: only states 0 (blank) and 1 (first label) are reachable.
    alpha0 = jnp.full((B, S), NEG, dtype=jnp.float32)
    alpha0 = alpha0.at[:, 0].set(emit[0, :, 0])
    alpha0 = jnp.where((s_idx == 1) & (target_lengths[:, None] >= 1),
                       emit[0, :, 1:2], alpha0)
    alpha0 = jnp.where(valid_state, alpha0, NEG)

    def step(alpha, xs):
        t, e_t = xs                                               # e_t: (B, S)
        a1 = jnp.concatenate(
            [jnp.full((B, 1), NEG, jnp.float32), alpha[:, :-1]], axis=1)
        a2 = jnp.concatenate(
            [jnp.full((B, 2), NEG, jnp.float32), alpha[:, :-2]], axis=1)
        a2 = jnp.where(can_skip, a2, NEG)
        new = jnp.logaddexp(jnp.logaddexp(alpha, a1), a2) + e_t
        new = jnp.where(valid_state, new, NEG)
        active = (t < input_lengths)[:, None]
        return jnp.where(active, new, alpha), None

    alpha, _ = lax.scan(step, alpha0, (jnp.arange(1, T), emit[1:]))

    end_blank = jnp.take_along_axis(
        alpha, (2 * target_lengths)[:, None], axis=1)[:, 0]
    end_label = jnp.take_along_axis(
        alpha, jnp.maximum(2 * target_lengths - 1, 0)[:, None], axis=1)[:, 0]
    end_label = jnp.where(target_lengths > 0, end_label, NEG)
    loss = -jnp.logaddexp(end_blank, end_label)
    # zero_infinity=True
    loss = jnp.where(jnp.isinf(loss) | jnp.isnan(loss), 0.0, loss)
    # reduction='mean': each loss divided by its target length, then batch mean.
    loss = loss / jnp.maximum(target_lengths, 1).astype(loss.dtype)
    return loss.mean()


# ----------------------------------------------------------------------------
# TextLoss.forward equivalent
# ----------------------------------------------------------------------------
def text_loss_forward(inputs, pointer_mask, dail_mask, text_mask, train_mask,
                      y_true_recog, y_pred_recog):
    b = inputs.shape[0]
    n = inputs.shape[2] * inputs.shape[3]
    # NOTE: masks may be provided as uint8/bf16 by the caller — the kernel
    # casts internally, so narrower mask dtypes directly cut HBM traffic.
    dl = dice_losses_pallas(
        inputs.reshape(b, 3, n),
        pointer_mask.reshape(b, n),
        dail_mask.reshape(b, n),
        text_mask.reshape(b, n),
        train_mask.reshape(b, n))
    loss_pointer = dl[0].mean()
    loss_dail = dl[1].mean()
    loss_text = dl[2].mean()

    targets, target_lengths = y_true_recog
    log_probs, input_lengths = y_pred_recog
    recognition_loss = ctc_loss_mean(log_probs, targets,
                                     input_lengths, target_lengths)
    return loss_pointer, loss_dail, loss_text, recognition_loss


def _dice_ref(pred, tgt, mask):
    p = jax.nn.sigmoid(pred.reshape(pred.shape[0], -1).astype(jnp.float32))
    t = (tgt.reshape(tgt.shape[0], -1) > 0.5).astype(jnp.float32)
    m = mask.reshape(mask.shape[0], -1).astype(jnp.float32)
    p = p * m
    t = t * m
    a = jnp.sum(p * t, 1)
    b = jnp.sum(p * p, 1) + 0.001
    c = jnp.sum(t * t, 1) + 0.001
    return 1.0 - 2.0 * a / (b + c)


if __name__ == "__main__":
    key = jax.random.PRNGKey(0)
    k1, k2, k3, k4, k5, k6 = jax.random.split(key, 6)

    B, H, W = 2, 16, 16
    inputs = jax.random.normal(k1, (B, 3, H, W), jnp.float32)
    pointer_mask = (jax.random.uniform(k2, (B, H, W)) > 0.5).astype(jnp.float32)
    dail_mask = (jax.random.uniform(k3, (B, H, W)) > 0.5).astype(jnp.float32)
    text_mask = (jax.random.uniform(k4, (B, H, W)) > 0.5).astype(jnp.float32)
    train_mask = jnp.ones((B, H, W), jnp.float32)

    # Recognition head: (T, B, C) log-probs, per-sample input/target lengths.
    T, C, Lmax = 8, 32, 3
    logits = jax.random.normal(k5, (T, B, C), jnp.float32)
    log_probs = jax.nn.log_softmax(logits, axis=-1)
    targets = jax.random.randint(k6, (B, Lmax), 1, C, dtype=jnp.int32)
    target_lengths = jnp.array([3, 2], jnp.int32)
    input_lengths = jnp.array([T, T], jnp.int32)

    out = text_loss_forward(
        inputs, pointer_mask, dail_mask, text_mask, train_mask,
        (targets, target_lengths), (log_probs, input_lengths))
    out = jax.block_until_ready(out)

    # Light correctness check of the Pallas dice path against a pure-JAX ref.
    dl = jax.block_until_ready(dice_losses_pallas(
        inputs.reshape(B, 3, H * W),
        pointer_mask.reshape(B, -1),
        dail_mask.reshape(B, -1),
        text_mask.reshape(B, -1),
        train_mask.reshape(B, -1)))
    ref = jnp.stack([_dice_ref(inputs[:, 0], pointer_mask, train_mask),
                     _dice_ref(inputs[:, 1], dail_mask, train_mask),
                     _dice_ref(inputs[:, 2], text_mask, train_mask)], axis=0)
    np.testing.assert_allclose(np.asarray(dl), np.asarray(ref),
                               rtol=1e-4, atol=1e-5)

    print("KERNEL_OK")
</pallas_src>

<mosaic_0001>
module attributes {stable_mosaic.version = 11 : i64} {
  func.func @kernel(%arg0: i32, %arg1: i32, %arg2: memref<2x3x2x128xf32, #tpu.memory_space<vmem>>, %arg3: memref<2x2x128xf32, #tpu.memory_space<vmem>>, %arg4: memref<2x2x128xf32, #tpu.memory_space<vmem>>, %arg5: memref<2x2x128xf32, #tpu.memory_space<vmem>>, %arg6: memref<2x2x128xf32, #tpu.memory_space<vmem>>, %arg7: memref<1x3x3x2x128xf32, #tpu.memory_space<vmem>>, %arg8: memref<3x2x2x128xf32, #tpu.memory_space<vmem>>, %arg9: memref<3x2x2x128xf32, #tpu.memory_space<vmem>>, %arg10: memref<3x2x2x128xf32, #tpu.memory_space<vmem>>) attributes {dimension_semantics = [#tpu.dimension_semantics<parallel>, #tpu.dimension_semantics<arbitrary>], iteration_bounds = array<i64: 1, 1>, scalar_prefetch = 0 : i64, scratch_operands = 3 : i64, tpu.core_type = #tpu.core_type<tc>, window_params = [{transform_indices = @transform_0, window_bounds = array<i64: 2, 3, 2, 128>}, {transform_indices = @transform_1, window_bounds = array<i64: 2, 2, 128>}, {transform_indices = @transform_2, window_bounds = array<i64: 2, 2, 128>}, {transform_indices = @transform_3, window_bounds = array<i64: 2, 2, 128>}, {transform_indices = @transform_4, window_bounds = array<i64: 2, 2, 128>}, {transform_indices = @transform_5, window_bounds = array<i64: 1, 3, 3, 2, 128>}]} {
    %c0_i32 = arith.constant 0 : i32
    %0 = arith.cmpi eq, %arg1, %c0_i32 : i32
    %1 = arith.extui %0 : i1 to i32
    %c0_i32_0 = arith.constant 0 : i32
    %2 = arith.cmpi ne, %1, %c0_i32_0 : i32
    scf.if %2 {
      %cst_107 = arith.constant 0.000000e+00 : f32
      %118 = vector.broadcast %cst_107 : f32 to vector<3x2x2x128xf32>
      %c0_108 = arith.constant 0 : index
      %c0_109 = arith.constant 0 : index
      %c0_110 = arith.constant 0 : index
      %c0_111 = arith.constant 0 : index
      %119 = vector.load %arg8[%c0_108, %c0_109, %c0_110, %c0_111] : memref<3x2x2x128xf32, #tpu.memory_space<vmem>>, vector<3x2x2x128xf32>
      tpu.vector_store %arg8[%c0_108, %c0_109, %c0_110, %c0_111], %118 {strides = array<i32>} : memref<3x2x2x128xf32, #tpu.memory_space<vmem>>, vector<3x2x2x128xf32>,
      %cst_112 = arith.constant 0.000000e+00 : f32
      %120 = vector.broadcast %cst_112 : f32 to vector<3x2x2x128xf32>
      %c0_113 = arith.constant 0 : index
      %c0_114 = arith.constant 0 : index
      %c0_115 = arith.constant 0 : index
      %c0_116 = arith.constant 0 : index
      %121 = vector.load %arg9[%c0_113, %c0_114, %c0_115, %c0_116] : memref<3x2x2x128xf32, #tpu.memory_space<vmem>>, vector<3x2x2x128xf32>
      tpu.vector_store %arg9[%c0_113, %c0_114, %c0_115, %c0_116], %120 {strides = array<i32>} : memref<3x2x2x128xf32, #tpu.memory_space<vmem>>, vector<3x2x2x128xf32>,
      %cst_117 = arith.constant 0.000000e+00 : f32
      %122 = vector.broadcast %cst_117 : f32 to vector<3x2x2x128xf32>
      %c0_118 = arith.constant 0 : index
      %c0_119 = arith.constant 0 : index
      %c0_120 = arith.constant 0 : index
      %c0_121 = arith.constant 0 : index
      %123 = vector.load %arg10[%c0_118, %c0_119, %c0_120, %c0_121] : memref<3x2x2x128xf32, #tpu.memory_space<vmem>>, vector<3x2x2x128xf32>
      tpu.vector_store %arg10[%c0_118, %c0_119, %c0_120, %c0_121], %122 {strides = array<i32>} : memref<3x2x2x128xf32, #tpu.memory_space<vmem>>, vector<3x2x2x128xf32>,
    } else {
    }
    %c0 = arith.constant 0 : index
    %c0_1 = arith.constant 0 : index
    %c0_2 = arith.constant 0 : index
    %3 = vector.load %arg6[%c0, %c0_1, %c0_2] : memref<2x2x128xf32, #tpu.memory_space<vmem>>, vector<2x2x128xf32>
    %c0_3 = arith.constant 0 : index
    %c0_4 = arith.constant 0 : index
    %c0_5 = arith.constant 0 : index
    %c0_6 = arith.constant 0 : index
    %4 = vector.load %arg2[%c0_3, %c0_4, %c0_5, %c0_6] : memref<2x3x2x128xf32, #tpu.memory_space<vmem>>, vector<2x1x2x128xf32>
    %5 = vector.shape_cast %4 : vector<2x1x2x128xf32> to vector<2x2x128xf32>
    %cst = arith.constant 5.000000e-01 : f32
    %6 = vector.broadcast %cst : f32 to vector<2x2x128xf32>
    %7 = arith.mulf %6, %5 : vector<2x2x128xf32>
    %8 = math.tanh %7 : vector<2x2x128xf32>
    %cst_7 = arith.constant 5.000000e-01 : f32
    %9 = vector.broadcast %cst_7 : f32 to vector<2x2x128xf32>
    %10 = arith.mulf %9, %8 : vector<2x2x128xf32>
    %cst_8 = arith.constant 5.000000e-01 : f32
    %11 = vector.broadcast %cst_8 : f32 to vector<2x2x128xf32>
    %12 = arith.addf %10, %11 : vector<2x2x128xf32>
    %c0_9 = arith.constant 0 : index
    %c0_10 = arith.constant 0 : index
    %c0_11 = arith.constant 0 : index
    %13 = vector.load %arg3[%c0_9, %c0_10, %c0_11] : memref<2x2x128xf32, #tpu.memory_space<vmem>>, vector<2x2x128xf32>
    %cst_12 = arith.constant 5.000000e-01 : f32
    %14 = vector.broadcast %cst_12 : f32 to vector<2x2x128xf32>
    %15 = arith.cmpf ogt, %13, %14 : vector<2x2x128xf32>
    %16 = arith.extui %15 : vector<2x2x128xi1> to vector<2x2x128xi32>
    %17 = arith.sitofp %16 : vector<2x2x128xi32> to vector<2x2x128xf32>
    %18 = arith.mulf %12, %3 : vector<2x2x128xf32>
    %19 = arith.mulf %17, %3 : vector<2x2x128xf32>
    %c0_13 = arith.constant 0 : index
    %c0_14 = arith.constant 0 : index
    %c0_15 = arith.constant 0 : index
    %c0_16 = arith.constant 0 : index
    %20 = vector.load %arg8[%c0_13, %c0_14, %c0_15, %c0_16] : memref<3x2x2x128xf32, #tpu.memory_space<vmem>>, vector<1x2x2x128xf32>
    %21 = vector.shape_cast %20 : vector<1x2x2x128xf32> to vector<2x2x128xf32>
    %22 = arith.mulf %18, %19 : vector<2x2x128xf32>
    %23 = arith.addf %21, %22 : vector<2x2x128xf32>
    %c0_17 = arith.constant 0 : index
    %c0_18 = arith.constant 0 : index
    %c0_19 = arith.constant 0 : index
    %c0_20 = arith.constant 0 : index
    %24 = vector.load %arg8[%c0_17, %c0_18, %c0_19, %c0_20] : memref<3x2x2x128xf32, #tpu.memory_space<vmem>>, vector<1x2x2x128xf32>
    %25 = vector.shape_cast %24 : vector<1x2x2x128xf32> to vector<2x2x128xf32>
    %26 = vector.shape_cast %23 : vector<2x2x128xf32> to vector<1x2x2x128xf32>
    tpu.vector_store %arg8[%c0_17, %c0_18, %c0_19, %c0_20], %26 {strides = array<i32>} : memref<3x2x2x128xf32, #tpu.memory_space<vmem>>, vector<1x2x2x128xf32>,
    %c0_21 = arith.constant 0 : index
    %c0_22 = arith.constant 0 : index
    %c0_23 = arith.constant 0 : index
    %c0_24 = arith.constant 0 : index
    %27 = vector.load %arg9[%c0_21, %c0_22, %c0_23, %c0_24] : memref<3x2x2x128xf32, #tpu.memory_space<vmem>>, vector<1x2x2x128xf32>
    %28 = vector.shape_cast %27 : vector<1x2x2x128xf32> to vector<2x2x128xf32>
    %29 = arith.mulf %18, %18 : vector<2x2x128xf32>
    %30 = arith.addf %28, %29 : vector<2x2x128xf32>
    %c0_25 = arith.constant 0 : index
    %c0_26 = arith.constant 0 : index
    %c0_27 = arith.constant 0 : index
    %c0_28 = arith.constant 0 : index
    %31 = vector.load %arg9[%c0_25, %c0_26, %c0_27, %c0_28] : memref<3x2x2x128xf32, #tpu.memory_space<vmem>>, vector<1x2x2x128xf32>
    %32 = vector.shape_cast %31 : vector<1x2x2x128xf32> to vector<2x2x128xf32>
    %33 = vector.shape_cast %30 : vector<2x2x128xf32> to vector<1x2x2x128xf32>
    tpu.vector_store %arg9[%c0_25, %c0_26, %c0_27, %c0_28], %33 {strides = array<i32>} : memref<3x2x2x128xf32, #tpu.memory_space<vmem>>, vector<1x2x2x128xf32>,
    %c0_29 = arith.constant 0 : index
    %c0_30 = arith.constant 0 : index
    %c0_31 = arith.constant 0 : index
    %c0_32 = arith.constant 0 : index
    %34 = vector.load %arg10[%c0_29, %c0_30, %c0_31, %c0_32] : memref<3x2x2x128xf32, #tpu.memory_space<vmem>>, vector<1x2x2x128xf32>
    %35 = vector.shape_cast %34 : vector<1x2x2x128xf32> to vector<2x2x128xf32>
    %36 = arith.mulf %19, %19 : vector<2x2x128xf32>
    %37 = arith.addf %35, %36 : vector<2x2x128xf32>
    %c0_33 = arith.constant 0 : index
    %c0_34 = arith.constant 0 : index
    %c0_35 = arith.constant 0 : index
    %c0_36 = arith.constant 0 : index
    %38 = vector.load %arg10[%c0_33, %c0_34, %c0_35, %c0_36] : memref<3x2x2x128xf32, #tpu.memory_space<vmem>>, vector<1x2x2x128xf32>
    %39 = vector.shape_cast %38 : vector<1x2x2x128xf32> to vector<2x2x128xf32>
    %40 = vector.shape_cast %37 : vector<2x2x128xf32> to vector<1x2x2x128xf32>
    tpu.vector_store %arg10[%c0_33, %c0_34, %c0_35, %c0_36], %40 {strides = array<i32>} : memref<3x2x2x128xf32, #tpu.memory_space<vmem>>, vector<1x2x2x128xf32>,
    %c0_37 = arith.constant 0 : index
    %c1 = arith.constant 1 : index
    %c0_38 = arith.constant 0 : index
    %c0_39 = arith.constant 0 : index
    %41 = vector.load %arg2[%c0_37, %c1, %c0_38, %c0_39] : memref<2x3x2x128xf32, #tpu.memory_space<vmem>>, vector<2x1x2x128xf32>
    %42 = vector.shape_cast %41 : vector<2x1x2x128xf32> to vector<2x2x128xf32>
    %cst_40 = arith.constant 5.000000e-01 : f32
    %43 = vector.broadcast %cst_40 : f32 to vector<2x2x128xf32>
    %44 = arith.mulf %43, %42 : vector<2x2x128xf32>
    %45 = math.tanh %44 : vector<2x2x128xf32>
    %cst_41 = arith.constant 5.000000e-01 : f32
    %46 = vector.broadcast %cst_41 : f32 to vector<2x2x128xf32>
    %47 = arith.mulf %46, %45 : vector<2x2x128xf32>
    %cst_42 = arith.constant 5.000000e-01 : f32
    %48 = vector.broadcast %cst_42 : f32 to vector<2x2x128xf32>
    %49 = arith.addf %47, %48 : vector<2x2x128xf32>
    %c0_43 = arith.constant 0 : index
    %c0_44 = arith.constant 0 : index
    %c0_45 = arith.constant 0 : index
    %50 = vector.load %arg4[%c0_43, %c0_44, %c0_45] : memref<2x2x128xf32, #tpu.memory_space<vmem>>, vector<2x2x128xf32>
    %cst_46 = arith.constant 5.000000e-01 : f32
    %51 = vector.broadcast %cst_46 : f32 to vector<2x2x128xf32>
    %52 = arith.cmpf ogt, %50, %51 : vector<2x2x128xf32>
    %53 = arith.extui %52 : vector<2x2x128xi1> to vector<2x2x128xi32>
    %54 = arith.sitofp %53 : vector<2x2x128xi32> to vector<2x2x128xf32>
    %55 = arith.mulf %49, %3 : vector<2x2x128xf32>
    %56 = arith.mulf %54, %3 : vector<2x2x128xf32>
    %c1_47 = arith.constant 1 : index
    %c0_48 = arith.constant 0 : index
    %c0_49 = arith.constant 0 : index
    %c0_50 = arith.constant 0 : index
    %57 = vector.load %arg8[%c1_47, %c0_48, %c0_49, %c0_50] : memref<3x2x2x128xf32, #tpu.memory_space<vmem>>, vector<1x2x2x128xf32>
    %58 = vector.shape_cast %57 : vector<1x2x2x128xf32> to vector<2x2x128xf32>
    %59 = arith.mulf %55, %56 : vector<2x2x128xf32>
    %60 = arith.addf %58, %59 : vector<2x2x128xf32>
    %c1_51 = arith.constant 1 : index
    %c0_52 = arith.constant 0 : index
    %c0_53 = arith.constant 0 : index
    %c0_54 = arith.constant 0 : index
    %61 = vector.load %arg8[%c1_51, %c0_52, %c0_53, %c0_54] : memref<3x2x2x128xf32, #tpu.memory_space<vmem>>, vector<1x2x2x128xf32>
    %62 = vector.shape_cast %61 : vector<1x2x2x128xf32> to vector<2x2x128xf32>
    %63 = vector.shape_cast %60 : vector<2x2x128xf32> to vector<1x2x2x128xf32>
    tpu.vector_store %arg8[%c1_51, %c0_52, %c0_53, %c0_54], %63 {strides = array<i32>} : memref<3x2x2x128xf32, #tpu.memory_space<vmem>>, vector<1x2x2x128xf32>,
    %c1_55 = arith.constant 1 : index
    %c0_56 = arith.constant 0 : index
    %c0_57 = arith.constant 0 : index
    %c0_58 = arith.constant 0 : index
    %64 = vector.load %arg9[%c1_55, %c0_56, %c0_57, %c0_58] : memref<3x2x2x128xf32, #tpu.memory_space<vmem>>, vector<1x2x2x128xf32>
    %65 = vector.shape_cast %64 : vector<1x2x2x128xf32> to vector<2x2x128xf32>
    %66 = arith.mulf %55, %55 : vector<2x2x128xf32>
    %67 = arith.addf %65, %66 : vector<2x2x128xf32>
    %c1_59 = arith.constant 1 : index
    %c0_60 = arith.constant 0 : index
    %c0_61 = arith.constant 0 : index
    %c0_62 = arith.constant 0 : index
    %68 = vector.load %arg9[%c1_59, %c0_60, %c0_61, %c0_62] : memref<3x2x2x128xf32, #tpu.memory_space<vmem>>, vector<1x2x2x128xf32>
    %69 = vector.shape_cast %68 : vector<1x2x2x128xf32> to vector<2x2x128xf32>
    %70 = vector.shape_cast %67 : vector<2x2x128xf32> to vector<1x2x2x128xf32>
    tpu.vector_store %arg9[%c1_59, %c0_60, %c0_61, %c0_62], %70 {strides = array<i32>} : memref<3x2x2x128xf32, #tpu.memory_space<vmem>>, vector<1x2x2x128xf32>,
    %c1_63 = arith.constant 1 : index
    %c0_64 = arith.constant 0 : index
    %c0_65 = arith.constant 0 : index
    %c0_66 = arith.constant 0 : index
    %71 = vector.load %arg10[%c1_63, %c0_64, %c0_65, %c0_66] : memref<3x2x2x128xf32, #tpu.memory_space<vmem>>, vector<1x2x2x128xf32>
    %72 = vector.shape_cast %71 : vector<1x2x2x128xf32> to vector<2x2x128xf32>
    %73 = arith.mulf %56, %56 : vector<2x2x128xf32>
    %74 = arith.addf %72, %73 : vector<2x2x128xf32>
    %c1_67 = arith.constant 1 : index
    %c0_68 = arith.constant 0 : index
    %c0_69 = arith.constant 0 : index
    %c0_70 = arith.constant 0 : index
    %75 = vector.load %arg10[%c1_67, %c0_68, %c0_69, %c0_70] : memref<3x2x2x128xf32, #tpu.memory_space<vmem>>, vector<1x2x2x128xf32>
    %76 = vector.shape_cast %75 : vector<1x2x2x128xf32> to vector<2x2x128xf32>
    %77 = vector.shape_cast %74 : vector<2x2x128xf32> to vector<1x2x2x128xf32>
    tpu.vector_store %arg10[%c1_67, %c0_68, %c0_69, %c0_70], %77 {strides = array<i32>} : memref<3x2x2x128xf32, #tpu.memory_space<vmem>>, vector<1x2x2x128xf32>,
    %c0_71 = arith.constant 0 : index
    %c2 = arith.constant 2 : index
    %c0_72 = arith.constant 0 : index
    %c0_73 = arith.constant 0 : index
    %78 = vector.load %arg2[%c0_71, %c2, %c0_72, %c0_73] : memref<2x3x2x128xf32, #tpu.memory_space<vmem>>, vector<2x1x2x128xf32>
    %79 = vector.shape_cast %78 : vector<2x1x2x128xf32> to vector<2x2x128xf32>
    %cst_74 = arith.constant 5.000000e-01 : f32
    %80 = vector.broadcast %cst_74 : f32 to vector<2x2x128xf32>
    %81 = arith.mulf %80, %79 : vector<2x2x128xf32>
    %82 = math.tanh %81 : vector<2x2x128xf32>
    %cst_75 = arith.constant 5.000000e-01 : f32
    %83 = vector.broadcast %cst_75 : f32 to vector<2x2x128xf32>
    %84 = arith.mulf %83, %82 : vector<2x2x128xf32>
    %cst_76 = arith.constant 5.000000e-01 : f32
    %85 = vector.broadcast %cst_76 : f32 to vector<2x2x128xf32>
    %86 = arith.addf %84, %85 : vector<2x2x128xf32>
    %c0_77 = arith.constant 0 : index
    %c0_78 = arith.constant 0 : index
    %c0_79 = arith.constant 0 : index
    %87 = vector.load %arg5[%c0_77, %c0_78, %c0_79] : memref<2x2x128xf32, #tpu.memory_space<vmem>>, vector<2x2x128xf32>
    %cst_80 = arith.constant 5.000000e-01 : f32
    %88 = vector.broadcast %cst_80 : f32 to vector<2x2x128xf32>
    %89 = arith.cmpf ogt, %87, %88 : vector<2x2x128xf32>
    %90 = arith.extui %89 : vector<2x2x128xi1> to vector<2x2x128xi32>
    %91 = arith.sitofp %90 : vector<2x2x128xi32> to vector<2x2x128xf32>
    %92 = arith.mulf %86, %3 : vector<2x2x128xf32>
    %93 = arith.mulf %91, %3 : vector<2x2x128xf32>
    %c2_81 = arith.constant 2 : index
    %c0_82 = arith.constant 0 : index
    %c0_83 = arith.constant 0 : index
    %c0_84 = arith.constant 0 : index
    %94 = vector.load %arg8[%c2_81, %c0_82, %c0_83, %c0_84] : memref<3x2x2x128xf32, #tpu.memory_space<vmem>>, vector<1x2x2x128xf32>
    %95 = vector.shape_cast %94 : vector<1x2x2x128xf32> to vector<2x2x128xf32>
    %96 = arith.mulf %92, %93 : vector<2x2x128xf32>
    %97 = arith.addf %95, %96 : vector<2x2x128xf32>
    %c2_85 = arith.constant 2 : index
    %c0_86 = arith.constant 0 : index
    %c0_87 = arith.constant 0 : index
    %c0_88 = arith.constant 0 : index
    %98 = vector.load %arg8[%c2_85, %c0_86, %c0_87, %c0_88] : memref<3x2x2x128xf32, #tpu.memory_space<vmem>>, vector<1x2x2x128xf32>
    %99 = vector.shape_cast %98 : vector<1x2x2x128xf32> to vector<2x2x128xf32>
    %100 = vector.shape_cast %97 : vector<2x2x128xf32> to vector<1x2x2x128xf32>
    tpu.vector_store %arg8[%c2_85, %c0_86, %c0_87, %c0_88], %100 {strides = array<i32>} : memref<3x2x2x128xf32, #tpu.memory_space<vmem>>, vector<1x2x2x128xf32>,
    %c2_89 = arith.constant 2 : index
    %c0_90 = arith.constant 0 : index
    %c0_91 = arith.constant 0 : index
    %c0_92 = arith.constant 0 : index
    %101 = vector.load %arg9[%c2_89, %c0_90, %c0_91, %c0_92] : memref<3x2x2x128xf32, #tpu.memory_space<vmem>>, vector<1x2x2x128xf32>
    %102 = vector.shape_cast %101 : vector<1x2x2x128xf32> to vector<2x2x128xf32>
    %103 = arith.mulf %92, %92 : vector<2x2x128xf32>
    %104 = arith.addf %102, %103 : vector<2x2x128xf32>
    %c2_93 = arith.constant 2 : index
    %c0_94 = arith.constant 0 : index
    %c0_95 = arith.constant 0 : index
    %c0_96 = arith.constant 0 : index
    %105 = vector.load %arg9[%c2_93, %c0_94, %c0_95, %c0_96] : memref<3x2x2x128xf32, #tpu.memory_space<vmem>>, vector<1x2x2x128xf32>
    %106 = vector.shape_cast %105 : vector<1x2x2x128xf32> to vector<2x2x128xf32>
    %107 = vector.shape_cast %104 : vector<2x2x128xf32> to vector<1x2x2x128xf32>
    tpu.vector_store %arg9[%c2_93, %c0_94, %c0_95, %c0_96], %107 {strides = array<i32>} : memref<3x2x2x128xf32, #tpu.memory_space<vmem>>, vector<1x2x2x128xf32>,
    %c2_97 = arith.constant 2 : index
    %c0_98 = arith.constant 0 : index
    %c0_99 = arith.constant 0 : index
    %c0_100 = arith.constant 0 : index
    %108 = vector.load %arg10[%c2_97, %c0_98, %c0_99, %c0_100] : memref<3x2x2x128xf32, #tpu.memory_space<vmem>>, vector<1x2x2x128xf32>
    %109 = vector.shape_cast %108 : vector<1x2x2x128xf32> to vector<2x2x128xf32>
    %110 = arith.mulf %93, %93 : vector<2x2x128xf32>
    %111 = arith.addf %109, %110 : vector<2x2x128xf32>
    %c2_101 = arith.constant 2 : index
    %c0_102 = arith.constant 0 : index
    %c0_103 = arith.constant 0 : index
    %c0_104 = arith.constant 0 : index
    %112 = vector.load %arg10[%c2_101, %c0_102, %c0_103, %c0_104] : memref<3x2x2x128xf32, #tpu.memory_space<vmem>>, vector<1x2x2x128xf32>
    %113 = vector.shape_cast %112 : vector<1x2x2x128xf32> to vector<2x2x128xf32>
    %114 = vector.shape_cast %111 : vector<2x2x128xf32> to vector<1x2x2x128xf32>
    tpu.vector_store %arg10[%c2_101, %c0_102, %c0_103, %c0_104], %114 {strides = array<i32>} : memref<3x2x2x128xf32, #tpu.memory_space<vmem>>, vector<1x2x2x128xf32>,
    %c0_i32_105 = arith.constant 0 : i32
    %115 = arith.cmpi eq, %arg1, %c0_i32_105 : i32
    %116 = arith.extui %115 : i1 to i32
    %c0_i32_106 = arith.constant 0 : i32
    %117 = arith.cmpi ne, %116, %c0_i32_106 : i32
    scf.if %117 {
      %c0_107 = arith.constant 0 : index
      %c0_108 = arith.constant 0 : index
      %c0_109 = arith.constant 0 : index
      %c0_110 = arith.constant 0 : index
      %118 = vector.load %arg8[%c0_107, %c0_108, %c0_109, %c0_110] : memref<3x2x2x128xf32, #tpu.memory_space<vmem>>, vector<3x2x2x128xf32>
      %cst_111 = arith.constant dense<0.000000e+00> : vector<3x2x128xf32>
      %119 = vector.multi_reduction <add>, %118, %cst_111 [2] : vector<3x2x2x128xf32> to vector<3x2x128xf32>
      %c0_112 = arith.constant 0 : index
      %c0_113 = arith.constant 0 : index
      %c0_114 = arith.constant 0 : index
      %c0_115 = arith.constant 0 : index
      %c0_116 = arith.constant 0 : index
      %120 = vector.load %arg7[%c0_112, %c0_113, %c0_114, %c0_115, %c0_116] : memref<1x3x3x2x128xf32, #tpu.memory_space<vmem>>, vector<1x1x3x2x128xf32>
      %121 = vector.shape_cast %120 : vector<1x1x3x2x128xf32> to vector<3x2x128xf32>
      %122 = vector.shape_cast %119 : vector<3x2x128xf32> to vector<1x1x3x2x128xf32>
      tpu.vector_store %arg7[%c0_112, %c0_113, %c0_114, %c0_115, %c0_116], %122 {strides = array<i32>} : memref<1x3x3x2x128xf32, #tpu.memory_space<vmem>>, vector<1x1x3x2x128xf32>,
      %c0_117 = arith.constant 0 : index
      %c0_118 = arith.constant 0 : index
      %c0_119 = arith.constant 0 : index
      %c0_120 = arith.constant 0 : index
      %123 = vector.load %arg9[%c0_117, %c0_118, %c0_119, %c0_120] : memref<3x2x2x128xf32, #tpu.memory_space<vmem>>, vector<3x2x2x128xf32>
      %cst_121 = arith.constant dense<0.000000e+00> : vector<3x2x128xf32>
      %124 = vector.multi_reduction <add>, %123, %cst_121 [2] : vector<3x2x2x128xf32> to vector<3x2x128xf32>
      %c0_122 = arith.constant 0 : index
      %c1_123 = arith.constant 1 : index
      %c0_124 = arith.constant 0 : index
      %c0_125 = arith.constant 0 : index
      %c0_126 = arith.constant 0 : index
      %125 = vector.load %arg7[%c0_122, %c1_123, %c0_124, %c0_125, %c0_126] : memref<1x3x3x2x128xf32, #tpu.memory_space<vmem>>, vector<1x1x3x2x128xf32>
      %126 = vector.shape_cast %125 : vector<1x1x3x2x128xf32> to vector<3x2x128xf32>
      %127 = vector.shape_cast %124 : vector<3x2x128xf32> to vector<1x1x3x2x128xf32>
      tpu.vector_store %arg7[%c0_122, %c1_123, %c0_124, %c0_125, %c0_126], %127 {strides = array<i32>} : memref<1x3x3x2x128xf32, #tpu.memory_space<vmem>>, vector<1x1x3x2x128xf32>,
      %c0_127 = arith.constant 0 : index
      %c0_128 = arith.constant 0 : index
      %c0_129 = arith.constant 0 : index
      %c0_130 = arith.constant 0 : index
      %128 = vector.load %arg10[%c0_127, %c0_128, %c0_129, %c0_130] : memref<3x2x2x128xf32, #tpu.memory_space<vmem>>, vector<3x2x2x128xf32>
      %cst_131 = arith.constant dense<0.000000e+00> : vector<3x2x128xf32>
      %129 = vector.multi_reduction <add>, %128, %cst_131 [2] : vector<3x2x2x128xf32> to vector<3x2x128xf32>
      %c0_132 = arith.constant 0 : index
      %c2_133 = arith.constant 2 : index
      %c0_134 = arith.constant 0 : index
      %c0_135 = arith.constant 0 : index
      %c0_136 = arith.constant 0 : index
      %130 = vector.load %arg7[%c0_132, %c2_133, %c0_134, %c0_135, %c0_136] : memref<1x3x3x2x128xf32, #tpu.memory_space<vmem>>, vector<1x1x3x2x128xf32>
      %131 = vector.shape_cast %130 : vector<1x1x3x2x128xf32> to vector<3x2x128xf32>
      %132 = vector.shape_cast %129 : vector<3x2x128xf32> to vector<1x1x3x2x128xf32>
      tpu.vector_store %arg7[%c0_132, %c2_133, %c0_134, %c0_135, %c0_136], %132 {strides = array<i32>} : memref<1x3x3x2x128xf32, #tpu.memory_space<vmem>>, vector<1x1x3x2x128xf32>,
    } else {
    }
    return
  }
  func.func @transform_0(%arg0: i32, %arg1: i32) -> (i32, i32, i32, i32) {
    %c1_i32 = arith.constant 1 : i32
    %0 = arith.muli %arg0, %c1_i32 : i32
    %1 = arith.addi %0, %arg1 : i32
    %c0_i32 = arith.constant 0 : i32
    %2 = arith.minsi %1, %c0_i32 : i32
    %c0_i32_0 = arith.constant 0 : i32
    %c0_i32_1 = arith.constant 0 : i32
    %c0_i32_2 = arith.constant 0 : i32
    %c0_i32_3 = arith.constant 0 : i32
    return %c0_i32_0, %c0_i32_1, %2, %c0_i32_2 : i32, i32, i32, i32
  }
  func.func @transform_1(%arg0: i32, %arg1: i32) -> (i32, i32, i32) {
    %c1_i32 = arith.constant 1 : i32
    %0 = arith.muli %arg0, %c1_i32 : i32
    %1 = arith.addi %0, %arg1 : i32
    %c0_i32 = arith.constant 0 : i32
    %2 = arith.minsi %1, %c0_i32 : i32
    %c0_i32_0 = arith.constant 0 : i32
    %c0_i32_1 = arith.constant 0 : i32
    %c0_i32_2 = arith.constant 0 : i32
    return %c0_i32_0, %2, %c0_i32_1 : i32, i32, i32
  }
  func.func @transform_2(%arg0: i32, %arg1: i32) -> (i32, i32, i32) {
    %c1_i32 = arith.constant 1 : i32
    %0 = arith.muli %arg0, %c1_i32 : i32
    %1 = arith.addi %0, %arg1 : i32
    %c0_i32 = arith.constant 0 : i32
    %2 = arith.minsi %1, %c0_i32 : i32
    %c0_i32_0 = arith.constant 0 : i32
    %c0_i32_1 = arith.constant 0 : i32
    %c0_i32_2 = arith.constant 0 : i32
    return %c0_i32_0, %2, %c0_i32_1 : i32, i32, i32
  }
  func.func @transform_3(%arg0: i32, %arg1: i32) -> (i32, i32, i32) {
    %c1_i32 = arith.constant 1 : i32
    %0 = arith.muli %arg0, %c1_i32 : i32
    %1 = arith.addi %0, %arg1 : i32
    %c0_i32 = arith.constant 0 : i32
    %2 = arith.minsi %1, %c0_i32 : i32
    %c0_i32_0 = arith.constant 0 : i32
    %c0_i32_1 = arith.constant 0 : i32
    %c0_i32_2 = arith.constant 0 : i32
    return %c0_i32_0, %2, %c0_i32_1 : i32, i32, i32
  }
  func.func @transform_4(%arg0: i32, %arg1: i32) -> (i32, i32, i32) {
    %c1_i32 = arith.constant 1 : i32
    %0 = arith.muli %arg0, %c1_i32 : i32
    %1 = arith.addi %0, %arg1 : i32
    %c0_i32 = arith.constant 0 : i32
    %2 = arith.minsi %1, %c0_i32 : i32
    %c0_i32_0 = arith.constant 0 : i32
    %c0_i32_1 = arith.constant 0 : i32
    %c0_i32_2 = arith.constant 0 : i32
    return %c0_i32_0, %2, %c0_i32_1 : i32, i32, i32
  }
  func.func @transform_5(%arg0: i32, %arg1: i32) -> (i32, i32, i32, i32, i32) {
    %c0_i32 = arith.constant 0 : i32
    %c0_i32_0 = arith.constant 0 : i32
    %c0_i32_1 = arith.constant 0 : i32
    %c0_i32_2 = arith.constant 0 : i32
    %c0_i32_3 = arith.constant 0 : i32
    return %arg0, %c0_i32, %c0_i32_0, %c0_i32_1, %c0_i32_2 : i32, i32, i32, i32, i32
  }
}

</mosaic_0001>

<llo_original>
// kernel: tpu_custom_call.1
$region0: #{tpu_custom_call.1}
  #allocation0 [shape = 'u32[]', space=smem, size = 0x4, offset = 0x4, fixed_abs, tag = 'smem constant byte address 0x4 - core index']
  #allocation1 [shape = 'u32[144,128]{1,0:T(1,128)}', space=vmem, size = 0x12000, scoped, tag = 'internal scratch']
  #allocation2 [shape = 'f32[3,2,2,128]{3,2,1,0:T(2,128)}', space=vmem, size = 0x1800, scoped, tag = 'scratch operand']
  #allocation3 [shape = 'f32[3,2,2,128]{3,2,1,0:T(2,128)}', space=vmem, size = 0x1800, scoped, tag = 'scratch operand']
  #allocation4 [shape = 'f32[3,2,2,128]{3,2,1,0:T(2,128)}', space=vmem, size = 0x1800, scoped, tag = 'scratch operand']
  %s0 = inlined_call_operand.hbm [shape: f32[2,3,2,128], index: 0, kind: input, shape index: {}]
  %s1 = inlined_call_operand.hbm [shape: f32[2,2,128], index: 1, kind: input, shape index: {}]
  %s2 = inlined_call_operand.vmem [shape: f32[2,2,128], index: 2, kind: input, shape index: {}]
  %s3 = inlined_call_operand.vmem [shape: f32[2,2,128], index: 3, kind: input, shape index: {}]
  %s4 = inlined_call_operand.vmem [shape: f32[2,2,128], index: 4, kind: input, shape index: {}]
  %s5 = inlined_call_operand.hbm [shape: f32[1,3,3,2,128], index: 5, kind: output, shape index: {}]
  %s6 = sld [smem:[#allocation0]]
  $region46: #{tpu_custom_call.1} parent=0
    _
  %s8 = ssub.s32 1, %s6
  %s9 = scalar_select 0, %s8, %s6
  $region1: #{tpu_custom_call.1} parent=0
    #allocation5 [shape = 'u8[6144]{0}', space=vmem, size = 0x1800, scoped, tag = 'input window, operand 0, single buffered']
    #allocation6 [shape = 's32[1]{0}', space=sflag, size = 0x4, scoped, tag = 'scoped memory for tpu_custom_call.1']
    #allocation7 [shape = 's32[1]{0}', space=sflag, size = 0x4, scoped, tag = 'scoped memory for tpu_custom_call.1']
    #allocation8 [shape = 'u8[2048]{0}', space=vmem, size = 0x800, scoped, tag = 'input window, operand 1, single buffered']
    #allocation9 [shape = 's32[1]{0}', space=sflag, size = 0x4, scoped, tag = 'scoped memory for tpu_custom_call.1']
    #allocation10 [shape = 'u8[9216]{0}', space=vmem, size = 0x2400, scoped, tag = 'output window, operand 0, single buffered']
    %10 = vsyncpa [#allocation6], 0
    %11 = vsyncpa [#allocation9], 0
    %12 = vsyncpa [#allocation7], 0
    // Predicated region
    $region2: #{tpu_custom_call.1} parent=1 // pred_check
      _
    $region3: #{tpu_custom_call.1} parent=1 // pred_check_branch
      %14 = sbr.rel (0) target = $region5
    $region4: #{tpu_custom_call.1} parent=1 // pred_region
      %s15 = sadd.s32 0, 0
      %p16 = scmp.lt.s32.totalorder %s15, 0
      %s17 = scalar_select %p16, %s15, 0
      %s19 = ssub.s32 192, 192
      %20 = vsyncadd [#allocation6], %s19
      %s21 = smul.addr %s17, 32
      %s22 = scalar_lea.hbm %s0, %s21
      %s23 = sshll.u32 [#allocation5], 4
      %s24 = int_to_ptr.vmem [resolvable:$true] %s23
      %29 = dma.hbm_to_vmem [thread:$0]  %s22, 192, %s24, [#allocation6], 32, 32, 2
    $region5: #{tpu_custom_call.1} parent=1 // pred_fallthru
      _
    // Predicated region
    $region6: #{tpu_custom_call.1} parent=1 // pred_check
      _
    $region7: #{tpu_custom_call.1} parent=1 // pred_check_branch
      %31 = sbr.rel (0) target = $region9
    $region8: #{tpu_custom_call.1} parent=1 // pred_region
      %s32 = sadd.s32 0, 0
      %p33 = scmp.lt.s32.totalorder %s32, 0
      %s34 = scalar_select %p33, %s32, 0
      %s36 = ssub.s32 64, 64
      %37 = vsyncadd [#allocation9], %s36
      %s38 = smul.addr %s34, 32
      %s39 = scalar_lea.hbm %s1, %s38
      %s40 = sshll.u32 [#allocation8], 4
      %s41 = int_to_ptr.vmem [resolvable:$true] %s40
      %46 = dma.hbm_to_vmem [thread:$0]  %s39, 64, %s41, [#allocation9], 32, 32, 2
    $region9: #{tpu_custom_call.1} parent=1 // pred_fallthru
      _
    // Predicated region
    $region10: #{tpu_custom_call.1} parent=1 // pred_check
      _
    $region11: #{tpu_custom_call.1} parent=1 // pred_check_branch
      %48 = sbr.rel (0) target = $region13
    $region12: #{tpu_custom_call.1} parent=1 // pred_region
      %s49 = sadd.s32 0, 0
      %p50 = scmp.lt.s32.totalorder %s49, 0
      %s51 = scalar_select %p50, %s49, 0
      %p52 = scmp.lt.s32.totalorder %s51, 0
      %s53 = scalar_select %p52, %s51, 0
      %s54 = smul.addr %s53, 2
      %s55 = scalar_lea.vmem %s2, %s54
      %s56 = sadd.s32 0, 0
      %p57 = scmp.lt.s32.totalorder %s56, 0
      %s58 = scalar_select %p57, %s56, 0
    $region13: #{tpu_custom_call.1} parent=1 // pred_fallthru
      _
    // Predicated region
    $region14: #{tpu_custom_call.1} parent=1 // pred_check
      _
    $region15: #{tpu_custom_call.1} parent=1 // pred_check_branch
      %60 = sbr.rel (0) target = $region17
    $region16: #{tpu_custom_call.1} parent=1 // pred_region
      %s61 = sadd.s32 0, 0
      %p62 = scmp.lt.s32.totalorder %s61, 0
      %s63 = scalar_select %p62, %s61, 0
      %p64 = scmp.lt.s32.totalorder %s63, 0
      %s65 = scalar_select %p64, %s63, 0
      %s66 = smul.addr %s65, 2
      %s67 = scalar_lea.vmem %s3, %s66
      %s68 = sadd.s32 0, 0
      %p69 = scmp.lt.s32.totalorder %s68, 0
      %s70 = scalar_select %p69, %s68, 0
    $region17: #{tpu_custom_call.1} parent=1 // pred_fallthru
      _
    // Predicated region
    $region18: #{tpu_custom_call.1} parent=1 // pred_check
      _
    $region19: #{tpu_custom_call.1} parent=1 // pred_check_branch
      %72 = sbr.rel (0) target = $region21
    $region20: #{tpu_custom_call.1} parent=1 // pred_region
      %s73 = sadd.s32 0, 0
      %p74 = scmp.lt.s32.totalorder %s73, 0
      %s75 = scalar_select %p74, %s73, 0
      %p76 = scmp.lt.s32.totalorder %s75, 0
      %s77 = scalar_select %p76, %s75, 0
      %s78 = smul.addr %s77, 2
      %s79 = scalar_lea.vmem %s4, %s78
      %s80 = sadd.s32 0, 0
      %p81 = scmp.lt.s32.totalorder %s80, 0
      %s82 = scalar_select %p81, %s80, 0
    $region21: #{tpu_custom_call.1} parent=1 // pred_fallthru
      _
    // Predicated region
    $region22: #{tpu_custom_call.1} parent=1 // pred_check
      _
    $region23: #{tpu_custom_call.1} parent=1 // pred_check_branch
      %84 = sbr.rel (0) target = $region25
    $region24: #{tpu_custom_call.1} parent=1 // pred_region
      %85 = dma.done [#allocation6], 192
    $region25: #{tpu_custom_call.1} parent=1 // pred_fallthru
      _
    // Predicated region
    $region26: #{tpu_custom_call.1} parent=1 // pred_check
      _
    $region27: #{tpu_custom_call.1} parent=1 // pred_check_branch
      %87 = sbr.rel (0) target = $region29
    $region28: #{tpu_custom_call.1} parent=1 // pred_region
      %88 = dma.done [#allocation9], 64
    $region29: #{tpu_custom_call.1} parent=1 // pred_fallthru
      _
    %s89 = sadd.s32 0, 0
    %p90 = scmp.lt.s32.totalorder %s89, 0
    %s91 = scalar_select %p90, %s89, 0
    %p92 = scmp.lt.s32.totalorder %s91, 0
    %s93 = scalar_select %p92, %s91, 0
    %s94 = smul.addr %s93, 2
    %s95 = scalar_lea.vmem %s2, %s94
    %s96 = sadd.s32 0, 0
    %p97 = scmp.lt.s32.totalorder %s96, 0
    %s98 = scalar_select %p97, %s96, 0
    %p99 = scmp.lt.s32.totalorder %s98, 0
    %s100 = scalar_select %p99, %s98, 0
    %s101 = smul.addr %s100, 2
    %s102 = scalar_lea.vmem %s3, %s101
    %s103 = sadd.s32 0, 0
    %p104 = scmp.lt.s32.totalorder %s103, 0
    %s105 = scalar_select %p104, %s103, 0
    %p106 = scmp.lt.s32.totalorder %s105, 0
    %s107 = scalar_select %p106, %s105, 0
    %s108 = smul.addr %s107, 2
    %s109 = scalar_lea.vmem %s4, %s108
    %s110 = sadd.s32 0, 0
    %p111 = scmp.lt.s32.totalorder %s110, 0
    %s112 = scalar_select %p111, %s110, 0
    %s113 = sadd.s32 0, 0
    %p114 = scmp.lt.s32.totalorder %s113, 0
    %s115 = scalar_select %p114, %s113, 0
    %s116 = sadd.s32 0, 0
    %p117 = scmp.lt.s32.totalorder %s116, 0
    %s118 = scalar_select %p117, %s116, 0
    %p119 = scmp.lt.s32.totalorder %s118, 0
    %s120 = scalar_select %p119, %s118, 0
    %s121 = smul.addr %s120, 2
    %s122 = scalar_lea.vmem %s2, %s121
    %s123 = sadd.s32 0, 0
    %p124 = scmp.lt.s32.totalorder %s123, 0
    %s125 = scalar_select %p124, %s123, 0
    %s126 = sadd.s32 0, 0
    %p127 = scmp.lt.s32.totalorder %s126, 0
    %s128 = scalar_select %p127, %s126, 0
    %p129 = scmp.lt.s32.totalorder %s128, 0
    %s130 = scalar_select %p129, %s128, 0
    %s131 = smul.addr %s130, 2
    %s132 = scalar_lea.vmem %s3, %s131
    %s133 = sadd.s32 0, 0
    %p134 = scmp.lt.s32.totalorder %s133, 0
    %s135 = scalar_select %p134, %s133, 0
    %s136 = sadd.s32 0, 0
    %p137 = scmp.lt.s32.totalorder %s136, 0
    %s138 = scalar_select %p137, %s136, 0
    %p139 = scmp.lt.s32.totalorder %s138, 0
    %s140 = scalar_select %p139, %s138, 0
    %s141 = smul.addr %s140, 2
    %s142 = scalar_lea.vmem %s4, %s141
    %s143 = sadd.s32 0, 0
    %p144 = scmp.lt.s32.totalorder %s143, 0
    %s145 = scalar_select %p144, %s143, 0
    %p146 = scmp.eq.s32.totalorder 0, 0
    // Predicated region
    $region30: #{tpu_custom_call.1} parent=1 // pred_check
      %p147 = pneg %p146
    $region31: #{tpu_custom_call.1} parent=1 // pred_check_branch
      %149 = sbr.rel (%p147) target = $region33
    $region32: #{tpu_custom_call.1} parent=1 // pred_region
      %150 = vst [vmem:[#allocation2] sm:$0x3] 0.0
      %151 = vst [vmem:[#allocation2 + $0x2] sm:$0x3] 0.0
      %152 = vst [vmem:[#allocation2 + $0x4] sm:$0x3] 0.0
      %153 = vst [vmem:[#allocation2 + $0x6] sm:$0x3] 0.0
      %154 = vst [vmem:[#allocation2 + $0x8] sm:$0x3] 0.0
      %155 = vst [vmem:[#allocation2 + $0xa] sm:$0x3] 0.0
      %156 = vst [vmem:[#allocation3] sm:$0x3] 0.0
      %157 = vst [vmem:[#allocation3 + $0x2] sm:$0x3] 0.0
      %158 = vst [vmem:[#allocation3 + $0x4] sm:$0x3] 0.0
      %159 = vst [vmem:[#allocation3 + $0x6] sm:$0x3] 0.0
      %160 = vst [vmem:[#allocation3 + $0x8] sm:$0x3] 0.0
      %161 = vst [vmem:[#allocation3 + $0xa] sm:$0x3] 0.0
      %162 = vst [vmem:[#allocation4] sm:$0x3] 0.0
      %163 = vst [vmem:[#allocation4 + $0x2] sm:$0x3] 0.0
      %164 = vst [vmem:[#allocation4 + $0x4] sm:$0x3] 0.0
      %165 = vst [vmem:[#allocation4 + $0x6] sm:$0x3] 0.0
      %166 = vst [vmem:[#allocation4 + $0x8] sm:$0x3] 0.0
      %167 = vst [vmem:[#allocation4 + $0xa] sm:$0x3] 0.0
    $region33: #{tpu_custom_call.1} parent=1 // pred_fallthru
      _
    %v168 = vld [vmem:[%s142] sm:$0x3]
    %v169 = vld [vmem:[%s142 + $0x2] sm:$0x3]
    %v170 = vld [vmem:[#allocation5] sm:$0x3]
    %v171 = vld [vmem:[#allocation5 + $0x6] sm:$0x3]
    %v172 = vmul.f32 %v170, 0.5
    %v173 = vmul.f32 %v171, 0.5
    %v174 = vtanh.pop %v172
    %v175 = vtanh.pop %v173
    %v176 = vmul.f32 %v174, 0.5
    %v177 = vmul.f32 %v175, 0.5
    %v178 = vadd.f32 %v176, 0.5
    %v179 = vadd.f32 %v177, 0.5
    %v180 = vld [vmem:[#allocation8] sm:$0x3]
    %v181 = vld [vmem:[#allocation8 + $0x2] sm:$0x3]
    %vm182 = vcmp.gt.f32.partialorder %v180, 0.5
    %vm183 = vcmp.gt.f32.partialorder %v181, 0.5
    %v184 = vsel %vm182, 1, 0
    %v185 = vsel %vm183, 1, 0
    %v186 = vcvt.s32.f32 %v184
    %v187 = vcvt.s32.f32 %v185
    %v188 = vmul.f32 %v178, %v168
    %v189 = vmul.f32 %v179, %v169
    %v190 = vmul.f32 %v186, %v168
    %v191 = vmul.f32 %v187, %v169
    %v192 = vld [vmem:[#allocation2] sm:$0x3]
    %v193 = vld [vmem:[#allocation2 + $0x2] sm:$0x3]
    %v194 = vmul.f32 %v188, %v190
    %v195 = vmul.f32 %v189, %v191
    %v196 = vadd.f32 %v192, %v194
    %v197 = vadd.f32 %v193, %v195
    %198 = vst [vmem:[#allocation2] sm:$0x3] %v196
    %199 = vst [vmem:[#allocation2 + $0x2] sm:$0x3] %v197
    %v200 = vld [vmem:[#allocation3] sm:$0x3]
    %v201 = vld [vmem:[#allocation3 + $0x2] sm:$0x3]
    %v202 = vmul.f32 %v188, %v188
    %v203 = vmul.f32 %v189, %v189
    %v204 = vadd.f32 %v200, %v202
    %v205 = vadd.f32 %v201, %v203
    %206 = vst [vmem:[#allocation3] sm:$0x3] %v204
    %207 = vst [vmem:[#allocation3 + $0x2] sm:$0x3] %v205
    %v208 = vld [vmem:[#allocation4] sm:$0x3]
    %v209 = vld [vmem:[#allocation4 + $0x2] sm:$0x3]
    %v210 = vmul.f32 %v190, %v190
    %v211 = vmul.f32 %v191, %v191
    %v212 = vadd.f32 %v208, %v210
    %v213 = vadd.f32 %v209, %v211
    %214 = vst [vmem:[#allocation4] sm:$0x3] %v212
    %215 = vst [vmem:[#allocation4 + $0x2] sm:$0x3] %v213
    %s216 = scalar_lea.vmem [#allocation5], 2
    %v217 = vld [vmem:[%s216] sm:$0x3]
    %v218 = vld [vmem:[%s216 + $0x6] sm:$0x3]
    %v219 = vmul.f32 %v217, 0.5
    %v220 = vmul.f32 %v218, 0.5
    %v221 = vtanh.pop %v219
    %v222 = vtanh.pop %v220
    %v223 = vmul.f32 %v221, 0.5
    %v224 = vmul.f32 %v222, 0.5
    %v225 = vadd.f32 %v223, 0.5
    %v226 = vadd.f32 %v224, 0.5
    %v227 = vld [vmem:[%s122] sm:$0x3]
    %v228 = vld [vmem:[%s122 + $0x2] sm:$0x3]
    %vm229 = vcmp.gt.f32.partialorder %v227, 0.5
    %vm230 = vcmp.gt.f32.partialorder %v228, 0.5
    %v231 = vsel %vm229, 1, 0
    %v232 = vsel %vm230, 1, 0
    %v233 = vcvt.s32.f32 %v231
    %v234 = vcvt.s32.f32 %v232
    %v235 = vmul.f32 %v225, %v168
    %v236 = vmul.f32 %v226, %v169
    %v237 = vmul.f32 %v233, %v168
    %v238 = vmul.f32 %v234, %v169
    %s239 = scalar_lea.vmem [#allocation2], 4
    %v240 = vld [vmem:[%s239] sm:$0x3]
    %v241 = vld [vmem:[%s239 + $0x2] sm:$0x3]
    %v242 = vmul.f32 %v235, %v237
    %v243 = vmul.f32 %v236, %v238
    %v244 = vadd.f32 %v240, %v242
    %v245 = vadd.f32 %v241, %v243
    %246 = vst [vmem:[%s239] sm:$0x3] %v244
    %247 = vst [vmem:[%s239 + $0x2] sm:$0x3] %v245
    %s248 = scalar_lea.vmem [#allocation3], 4
    %v249 = vld [vmem:[%s248] sm:$0x3]
    %v250 = vld [vmem:[%s248 + $0x2] sm:$0x3]
    %v251 = vmul.f32 %v235, %v235
    %v252 = vmul.f32 %v236, %v236
    %v253 = vadd.f32 %v249, %v251
    %v254 = vadd.f32 %v250, %v252
    %255 = vst [vmem:[%s248] sm:$0x3] %v253
    %256 = vst [vmem:[%s248 + $0x2] sm:$0x3] %v254
    %s257 = scalar_lea.vmem [#allocation4], 4
    %v258 = vld [vmem:[%s257] sm:$0x3]
    %v259 = vld [vmem:[%s257 + $0x2] sm:$0x3]
    %v260 = vmul.f32 %v237, %v237
    %v261 = vmul.f32 %v238, %v238
    %v262 = vadd.f32 %v258, %v260
    %v263 = vadd.f32 %v259, %v261
    %264 = vst [vmem:[%s257] sm:$0x3] %v262
    %265 = vst [vmem:[%s257 + $0x2] sm:$0x3] %v263
    %s266 = scalar_lea.vmem [#allocation5], 4
    %v267 = vld [vmem:[%s266] sm:$0x3]
    %v268 = vld [vmem:[%s266 + $0x6] sm:$0x3]
    %v269 = vmul.f32 %v267, 0.5
    %v270 = vmul.f32 %v268, 0.5
    %v271 = vtanh.pop %v269
    %v272 = vtanh.pop %v270
    %v273 = vmul.f32 %v271, 0.5
    %v274 = vmul.f32 %v272, 0.5
    %v275 = vadd.f32 %v273, 0.5
    %v276 = vadd.f32 %v274, 0.5
    %v277 = vld [vmem:[%s132] sm:$0x3]
    %v278 = vld [vmem:[%s132 + $0x2] sm:$0x3]
    %vm279 = vcmp.gt.f32.partialorder %v277, 0.5
    %vm280 = vcmp.gt.f32.partialorder %v278, 0.5
    %v281 = vsel %vm279, 1, 0
    %v282 = vsel %vm280, 1, 0
    %v283 = vcvt.s32.f32 %v281
    %v284 = vcvt.s32.f32 %v282
    %v285 = vmul.f32 %v275, %v168
    %v286 = vmul.f32 %v276, %v169
    %v287 = vmul.f32 %v283, %v168
    %v288 = vmul.f32 %v284, %v169
    %s289 = scalar_lea.vmem [#allocation2], 8
    %v290 = vld [vmem:[%s289] sm:$0x3]
    %v291 = vld [vmem:[%s289 + $0x2] sm:$0x3]
    %v292 = vmul.f32 %v285, %v287
    %v293 = vmul.f32 %v286, %v288
    %v294 = vadd.f32 %v290, %v292
    %v295 = vadd.f32 %v291, %v293
    %296 = vst [vmem:[%s289] sm:$0x3] %v294
    %297 = vst [vmem:[%s289 + $0x2] sm:$0x3] %v295
    %s298 = scalar_lea.vmem [#allocation3], 8
    %v299 = vld [vmem:[%s298] sm:$0x3]
    %v300 = vld [vmem:[%s298 + $0x2] sm:$0x3]
    %v301 = vmul.f32 %v285, %v285
    %v302 = vmul.f32 %v286, %v286
    %v303 = vadd.f32 %v299, %v301
    %v304 = vadd.f32 %v300, %v302
    %305 = vst [vmem:[%s298] sm:$0x3] %v303
    %306 = vst [vmem:[%s298 + $0x2] sm:$0x3] %v304
    %s307 = scalar_lea.vmem [#allocation4], 8
    %v308 = vld [vmem:[%s307] sm:$0x3]
    %v309 = vld [vmem:[%s307 + $0x2] sm:$0x3]
    %v310 = vmul.f32 %v287, %v287
    %v311 = vmul.f32 %v288, %v288
    %v312 = vadd.f32 %v308, %v310
    %v313 = vadd.f32 %v309, %v311
    %314 = vst [vmem:[%s307] sm:$0x3] %v312
    %315 = vst [vmem:[%s307 + $0x2] sm:$0x3] %v313
    // Predicated region
    $region34: #{tpu_custom_call.1} parent=1 // pred_check
      %p316 = pneg %p146
    $region35: #{tpu_custom_call.1} parent=1 // pred_check_branch
      %318 = sbr.rel (%p316) target = $region37
    $region36: #{tpu_custom_call.1} parent=1 // pred_region
      %v319 = vld [vmem:[#allocation2] sm:$0x3]
      %v320 = vld [vmem:[#allocation2 + $0x2] sm:$0x3]
      %v321 = vld [vmem:[#allocation2 + $0x4] sm:$0x3]
      %v322 = vld [vmem:[#allocation2 + $0x6] sm:$0x3]
      %v323 = vld [vmem:[#allocation2 + $0x8] sm:$0x3]
      %v324 = vld [vmem:[#allocation2 + $0xa] sm:$0x3]
      %vm325 = vcmask 1041408
      %v326 = vsel %vm325, %v319, 0.0
      %v327 = vrot.slane %v326, 4
      %v328 = vadd.f32 %v326, %v327
      %v329 = vrot.slane %v328, 2
      %v330 = vadd.f32 %v328, %v329
      %v331 = vrot.slane %v330, 1
      %v332 = vadd.f32 %v330, %v331
      %v333 = vsel %vm325, %v320, 0.0
      %v334 = vrot.slane %v333, 4
      %v335 = vadd.f32 %v333, %v334
      %v336 = vrot.slane %v335, 2
      %v337 = vadd.f32 %v335, %v336
      %v338 = vrot.slane %v337, 1
      %v339 = vadd.f32 %v337, %v338
      %v340 = vsel %vm325, %v321, 0.0
      %v341 = vrot.slane %v340, 4
      %v342 = vadd.f32 %v340, %v341
      %v343 = vrot.slane %v342, 2
      %v344 = vadd.f32 %v342, %v343
      %v345 = vrot.slane %v344, 1
      %v346 = vadd.f32 %v344, %v345
      %v347 = vsel %vm325, %v322, 0.0
      %v348 = vrot.slane %v347, 4
      %v349 = vadd.f32 %v347, %v348
      %v350 = vrot.slane %v349, 2
      %v351 = vadd.f32 %v349, %v350
      %v352 = vrot.slane %v351, 1
      %v353 = vadd.f32 %v351, %v352
      %v354 = vsel %vm325, %v323, 0.0
      %v355 = vrot.slane %v354, 4
      %v356 = vadd.f32 %v354, %v355
      %v357 = vrot.slane %v356, 2
      %v358 = vadd.f32 %v356, %v357
      %v359 = vrot.slane %v358, 1
      %v360 = vadd.f32 %v358, %v359
      %v361 = vsel %vm325, %v324, 0.0
      %v362 = vrot.slane %v361, 4
      %v363 = vadd.f32 %v361, %v362
      %v364 = vrot.slane %v363, 2
      %v365 = vadd.f32 %v363, %v364
      %v366 = vrot.slane %v365, 1
      %v367 = vadd.f32 %v365, %v366
      %vm374 = vcmask 1041409
      %v375 = vsel %vm374, %v339, %v332
      %v376 = vsel %vm374, %v353, %v346
      %v377 = vsel %vm374, %v367, %v360
      %381 = vst [vmem:[#allocation10] sm:$0x3] %v375
      %382 = vst [vmem:[#allocation10 + $0x2] sm:$0x3] %v376
      %383 = vst [vmem:[#allocation10 + $0x4] sm:$0x3] %v377
      %v384 = vld [vmem:[#allocation3] sm:$0x3]
      %v385 = vld [vmem:[#allocation3 + $0x2] sm:$0x3]
      %v386 = vld [vmem:[#allocation3 + $0x4] sm:$0x3]
      %v387 = vld [vmem:[#allocation3 + $0x6] sm:$0x3]
      %v388 = vld [vmem:[#allocation3 + $0x8] sm:$0x3]
      %v389 = vld [vmem:[#allocation3 + $0xa] sm:$0x3]
      %v390 = vsel %vm325, %v384, 0.0
      %v391 = vrot.slane %v390, 4
      %v392 = vadd.f32 %v390, %v391
      %v393 = vrot.slane %v392, 2
      %v394 = vadd.f32 %v392, %v393
      %v395 = vrot.slane %v394, 1
      %v396 = vadd.f32 %v394, %v395
      %v397 = vsel %vm325, %v385, 0.0
      %v398 = vrot.slane %v397, 4
      %v399 = vadd.f32 %v397, %v398
      %v400 = vrot.slane %v399, 2
      %v401 = vadd.f32 %v399, %v400
      %v402 = vrot.slane %v401, 1
      %v403 = vadd.f32 %v401, %v402
      %v404 = vsel %vm325, %v386, 0.0
      %v405 = vrot.slane %v404, 4
      %v406 = vadd.f32 %v404, %v405
      %v407 = vrot.slane %v406, 2
      %v408 = vadd.f32 %v406, %v407
      %v409 = vrot.slane %v408, 1
      %v410 = vadd.f32 %v408, %v409
      %v411 = vsel %vm325, %v387, 0.0
      %v412 = vrot.slane %v411, 4
      %v413 = vadd.f32 %v411, %v412
      %v414 = vrot.slane %v413, 2
      %v415 = vadd.f32 %v413, %v414
      %v416 = vrot.slane %v415, 1
      %v417 = vadd.f32 %v415, %v416
      %v418 = vsel %vm325, %v388, 0.0
      %v419 = vrot.slane %v418, 4
      %v420 = vadd.f32 %v418, %v419
      %v421 = vrot.slane %v420, 2
      %v422 = vadd.f32 %v420, %v421
      %v423 = vrot.slane %v422, 1
      %v424 = vadd.f32 %v422, %v423
      %v425 = vsel %vm325, %v389, 0.0
      %v426 = vrot.slane %v425, 4
      %v427 = vadd.f32 %v425, %v426
      %v428 = vrot.slane %v427, 2
      %v429 = vadd.f32 %v427, %v428
      %v430 = vrot.slane %v429, 1
      %v431 = vadd.f32 %v429, %v430
      %v438 = vsel %vm374, %v403, %v396
      %v439 = vsel %vm374, %v417, %v410
      %v440 = vsel %vm374, %v431, %v424
      %s444 = scalar_lea.vmem [#allocation10], 6
      %445 = vst [vmem:[%s444] sm:$0x3] %v438
      %446 = vst [vmem:[%s444 + $0x2] sm:$0x3] %v439
      %447 = vst [vmem:[%s444 + $0x4] sm:$0x3] %v440
      %v448 = vld [vmem:[#allocation4] sm:$0x3]
      %v449 = vld [vmem:[#allocation4 + $0x2] sm:$0x3]
      %v450 = vld [vmem:[#allocation4 + $0x4] sm:$0x3]
      %v451 = vld [vmem:[#allocation4 + $0x6] sm:$0x3]
      %v452 = vld [vmem:[#allocation4 + $0x8] sm:$0x3]
      %v453 = vld [vmem:[#allocation4 + $0xa] sm:$0x3]
      %v454 = vsel %vm325, %v448, 0.0
      %v455 = vrot.slane %v454, 4
      %v456 = vadd.f32 %v454, %v455
      %v457 = vrot.slane %v456, 2
      %v458 = vadd.f32 %v456, %v457
      %v459 = vrot.slane %v458, 1
      %v460 = vadd.f32 %v458, %v459
      %v461 = vsel %vm325, %v449, 0.0
      %v462 = vrot.slane %v461, 4
      %v463 = vadd.f32 %v461, %v462
      %v464 = vrot.slane %v463, 2
      %v465 = vadd.f32 %v463, %v464
      %v466 = vrot.slane %v465, 1
      %v467 = vadd.f32 %v465, %v466
      %v468 = vsel %vm325, %v450, 0.0
      %v469 = vrot.slane %v468, 4
      %v470 = vadd.f32 %v468, %v469
      %v471 = vrot.slane %v470, 2
      %v472 = vadd.f32 %v470, %v471
      %v473 = vrot.slane %v472, 1
      %v474 = vadd.f32 %v472, %v473
      %v475 = vsel %vm325, %v451, 0.0
      %v476 = vrot.slane %v475, 4
      %v477 = vadd.f32 %v475, %v476
      %v478 = vrot.slane %v477, 2
      %v479 = vadd.f32 %v477, %v478
      %v480 = vrot.slane %v479, 1
      %v481 = vadd.f32 %v479, %v480
      %v482 = vsel %vm325, %v452, 0.0
      %v483 = vrot.slane %v482, 4
      %v484 = vadd.f32 %v482, %v483
      %v485 = vrot.slane %v484, 2
      %v486 = vadd.f32 %v484, %v485
      %v487 = vrot.slane %v486, 1
      %v488 = vadd.f32 %v486, %v487
      %v489 = vsel %vm325, %v453, 0.0
      %v490 = vrot.slane %v489, 4
      %v491 = vadd.f32 %v489, %v490
      %v492 = vrot.slane %v491, 2
      %v493 = vadd.f32 %v491, %v492
      %v494 = vrot.slane %v493, 1
      %v495 = vadd.f32 %v493, %v494
      %v502 = vsel %vm374, %v467, %v460
      %v503 = vsel %vm374, %v481, %v474
      %v504 = vsel %vm374, %v495, %v488
      %s508 = scalar_lea.vmem [#allocation10], 12
      %509 = vst [vmem:[%s508] sm:$0x3] %v502
      %510 = vst [vmem:[%s508 + $0x2] sm:$0x3] %v503
      %511 = vst [vmem:[%s508 + $0x4] sm:$0x3] %v504
    $region37: #{tpu_custom_call.1} parent=1 // pred_fallthru
      _
    // Predicated region
    $region38: #{tpu_custom_call.1} parent=1 // pred_check
      _
    $region39: #{tpu_custom_call.1} parent=1 // pred_check_branch
      %513 = sbr.rel (0) target = $region41
    $region40: #{tpu_custom_call.1} parent=1 // pred_region
      %s515 = ssub.s32 288, 288
      %516 = vsyncadd [#allocation7], %s515
      %s517 = sshll.u32 [#allocation10], 4
      %s518 = int_to_ptr.vmem [resolvable:$true] %s517
      %523 = dma.vmem_to_hbm [thread:$0]  %s518, 288, %s5, [#allocation7], 32, 32, 2
    $region41: #{tpu_custom_call.1} parent=1 // pred_fallthru
      _
    // Predicated region
    $region42: #{tpu_custom_call.1} parent=1 // pred_check
      _
    $region43: #{tpu_custom_call.1} parent=1 // pred_check_branch
      %525 = sbr.rel (0) target = $region45
    $region44: #{tpu_custom_call.1} parent=1 // pred_region
      %526 = dma.done [#allocation7], 288
    $region45: #{tpu_custom_call.1} parent=1 // pred_fallthru
      _
    %527 = vsyncpa [#allocation6], 1
    %528 = vsyncpa [#allocation9], 1
    %529 = vsyncpa [#allocation7], 1

</llo_original>
